<compile_context>
chip_gen: v7x
topology: tpu7x:2x2x1
jax: 0.10.0
libtpu: 0.0.40
codegen_flags: <defaults>
</compile_context>

<pallas_src>
import functools

import jax
import jax.numpy as jnp
from jax import lax
from jax.experimental import pallas as pl
from jax.experimental.pallas import tpu as pltpu


def _block1d_kernel(x_ref, w_ref, b_ref, gamma_ref, beta_ref, mask_ref, out_ref,
                    *, groups: int, eps: float, K: int, L_valid: int):
    # x_ref:     (1, Cin, Lin)    halo-padded input, Lin = Lp + K - 1
    # w_ref:     (Cout, K*Cin)    conv weight, columns ordered k*Cin + cin
    # b_ref:     (Cout, 1)        conv bias (f32)
    # gamma_ref: (Cout, 1)        GroupNorm weight (f32)
    # beta_ref:  (Cout, 1)        GroupNorm bias (f32)
    # mask_ref:  (1, 1, Lp)       float mask (1.0 keep / 0.0 zero-out)
    # out_ref:   (1, Cout, Lp)    lane-dense output (Lp multiple of 128)
    x = x_ref[0]                                   # (Cin, Lin)
    Cout = w_ref.shape[0]
    Lp = out_ref.shape[2]
    cg = Cout // groups

    # --- Conv1d: fold the K taps into one MXU contraction ---
    taps = [x[:, k:k + Lp] for k in range(K)]      # K static slices, (Cin, Lp) each
    stacked = jnp.concatenate(taps, axis=0) if K > 1 else taps[0]   # (K*Cin, Lp)
    y = jnp.dot(w_ref[...], stacked, preferred_element_type=jnp.float32)
    y = y + b_ref[...]                             # (Cout, Lp) + (Cout, 1)

    # --- GroupNorm statistics over the valid (unpadded) positions only ---
    lane = lax.broadcasted_iota(jnp.int32, (1, Lp), 1)
    valid = (lane < L_valid).astype(jnp.float32)   # (1, Lp)
    ym = y * valid                                 # zero padded lanes for the stats
    count = jnp.float32(cg * L_valid)

    sum_c = jnp.sum(ym, axis=1, keepdims=True)         # (Cout, 1)  lane reduce (XLU)
    sumsq_c = jnp.sum(ym * ym, axis=1, keepdims=True)  # (Cout, 1)
    gsum = jnp.sum(sum_c.reshape(groups, cg, 1), axis=1, keepdims=True)      # (G,1,1)
    gsumsq = jnp.sum(sumsq_c.reshape(groups, cg, 1), axis=1, keepdims=True)  # (G,1,1)
    gmean = gsum / count
    gvar = jnp.maximum(gsumsq / count - gmean * gmean, 0.0)   # clamp cancellation
    inv_std = lax.rsqrt(gvar + eps)                           # (G,1,1), EUP

    # --- Fused affine: out = y * a + c ---
    gamma3 = gamma_ref[...].reshape(groups, cg, 1)
    beta3 = beta_ref[...].reshape(groups, cg, 1)
    a3 = gamma3 * inv_std                          # (G, cg, 1)
    c3 = beta3 - gmean * a3                        # (G, cg, 1)
    out = y * a3.reshape(Cout, 1) + c3.reshape(Cout, 1)

    # --- masked_fill(~mask, 0.0) with exact NaN/Inf semantics ---
    m = mask_ref[0]                                # (1, Lp) broadcasts over (Cout, Lp)
    out = jnp.where(m != 0, out, 0.0)

    out_ref[0] = out.astype(out_ref.dtype)


def block1d_pallas(x, w, b, gamma, beta, mask, *, groups: int, eps: float = 1e-5,
                   compute_dtype=None):
    """x: (B, Cin, L); w: (Cout, Cin, K); b/gamma/beta: (Cout,); mask: (B,1,L) bool or None.

    compute_dtype: dtype fed to the MXU (e.g. jnp.bfloat16 on v6e/v7x); accumulation,
    GroupNorm stats and the epilogue stay in f32.
    """
    B, Cin, L = x.shape
    Cout, _, K = w.shape
    assert K % 2 == 1, "kernel_size must be odd"
    assert Cout % groups == 0
    pad = K // 2
    out_dtype = x.dtype
    if compute_dtype is None:
        compute_dtype = x.dtype

    # Lane-dense output length (multiple of 128) + left/right halo for the conv taps.
    Lp = max(128, ((L + 127) // 128) * 128)
    Lin = Lp + 2 * pad

    x_ext = jnp.pad(x.astype(compute_dtype),
                    ((0, 0), (0, 0), (pad, Lin - L - pad)))          # (B, Cin, Lin)
    # Weight flattened so column index = k*Cin + cin (matches the stacked operand).
    w_flat = jnp.transpose(w, (0, 2, 1)).reshape(Cout, K * Cin).astype(compute_dtype)
    b2 = b.reshape(Cout, 1).astype(jnp.float32)
    g2 = gamma.reshape(Cout, 1).astype(jnp.float32)
    be2 = beta.reshape(Cout, 1).astype(jnp.float32)

    if mask is None:
        mask_f = jnp.ones((B, 1, Lp), jnp.float32)
    else:
        mask_f = jnp.pad(mask.astype(jnp.float32), ((0, 0), (0, 0), (0, Lp - L)))

    kernel = functools.partial(_block1d_kernel, groups=groups, eps=eps,
                               K=K, L_valid=L)

    out_full = pl.pallas_call(
        kernel,
        out_shape=jax.ShapeDtypeStruct((B, Cout, Lp), out_dtype),
        grid_spec=pltpu.PrefetchScalarGridSpec(
            num_scalar_prefetch=0,
            grid=(B,),
            in_specs=[
                pl.BlockSpec((1, Cin, Lin), lambda i: (i, 0, 0)),
                pl.BlockSpec((Cout, K * Cin), lambda i: (0, 0)),
                pl.BlockSpec((Cout, 1), lambda i: (0, 0)),
                pl.BlockSpec((Cout, 1), lambda i: (0, 0)),
                pl.BlockSpec((Cout, 1), lambda i: (0, 0)),
                pl.BlockSpec((1, 1, Lp), lambda i: (i, 0, 0)),
            ],
            out_specs=pl.BlockSpec((1, Cout, Lp), lambda i: (i, 0, 0)),
        ),
        compiler_params=pltpu.CompilerParams(
            dimension_semantics=("parallel",),
            vmem_limit_bytes=64 * 1024 * 1024,
        ),
    )(x_ext, w_flat, b2, g2, be2, mask_f)

    return out_full[:, :, :L]


def block1d_reference(x, w, b, gamma, beta, mask, *, groups: int, eps: float = 1e-5):
    """Pure-JAX reference matching torch Conv1d + GroupNorm + masked_fill."""
    B, Cin, L = x.shape
    Cout, _, K = w.shape
    y = lax.conv_general_dilated(
        x, w, window_strides=(1,), padding=[(K // 2, K // 2)],
        dimension_numbers=("NCH", "OIH", "NCH")) + b.reshape(1, Cout, 1)
    yg = y.reshape(B, groups, Cout // groups, L)
    mean = yg.mean(axis=(2, 3), keepdims=True)
    var = ((yg - mean) ** 2).mean(axis=(2, 3), keepdims=True)
    yn = ((yg - mean) / jnp.sqrt(var + eps)).reshape(B, Cout, L)
    out = yn * gamma.reshape(1, Cout, 1) + beta.reshape(1, Cout, 1)
    if mask is not None:
        out = jnp.where(mask, out, 0.0)
    return out


if __name__ == "__main__":
    # Small shapes consistent with Block1d(dims=32, out_dims=32, kernel_size=3, groups=4)
    B, Cin, Cout, L, K, G = 2, 32, 32, 16, 3, 4

    key = jax.random.PRNGKey(0)
    kx, kw, kb, km = jax.random.split(key, 4)

    x = jax.random.normal(kx, (B, Cin, L), jnp.float32)
    # Conv1d default init: U(-sqrt(1/(Cin*K)), sqrt(1/(Cin*K)))
    bound = 1.0 / (Cin * K) ** 0.5
    w = jax.random.uniform(kw, (Cout, Cin, K), jnp.float32, -bound, bound)
    b = jax.random.uniform(kb, (Cout,), jnp.float32, -bound, bound)
    # GroupNorm default affine init
    gamma = jnp.ones((Cout,), jnp.float32)
    beta = jnp.zeros((Cout,), jnp.float32)
    # optional mask: (B, 1, L) bool
    mask = jax.random.bernoulli(km, 0.8, (B, 1, L))

    ref = block1d_reference(x, w, b, gamma, beta, mask, groups=G)

    # f32 MXU path (tight tolerance)
    out = jax.block_until_ready(block1d_pallas(x, w, b, gamma, beta, mask, groups=G))
    assert out.shape == (B, Cout, L)
    assert jnp.allclose(out, ref, atol=1e-4, rtol=1e-4), "f32 mismatch vs reference"

    # bf16 MXU inputs, f32 accumulation/epilogue (loose tolerance)
    out_bf16 = jax.block_until_ready(
        block1d_pallas(x, w, b, gamma, beta, mask, groups=G,
                       compute_dtype=jnp.bfloat16))
    assert jnp.allclose(out_bf16, ref, atol=5e-2, rtol=5e-2), "bf16 mismatch vs reference"

    print("KERNEL_OK")
</pallas_src>

<mosaic_0001>
module attributes {stable_mosaic.version = 11 : i64} {
  func.func @_block1d_kernel(%arg0: i32, %arg1: memref<1x32x130xf32, #tpu.memory_space<vmem>>, %arg2: memref<32x96xf32, #tpu.memory_space<vmem>>, %arg3: memref<32x1xf32, #tpu.memory_space<vmem>>, %arg4: memref<32x1xf32, #tpu.memory_space<vmem>>, %arg5: memref<32x1xf32, #tpu.memory_space<vmem>>, %arg6: memref<1x1x128xf32, #tpu.memory_space<vmem>>, %arg7: memref<1x32x128xf32, #tpu.memory_space<vmem>>) attributes {dimension_semantics = [#tpu.dimension_semantics<parallel>], iteration_bounds = array<i64: 2>, scalar_prefetch = 0 : i64, scratch_operands = 0 : i64, tpu.core_type = #tpu.core_type<tc>, window_params = [{transform_indices = @transform_0, window_bounds = array<i64: 1, 32, 130>}, {pipeline_mode = #tpu.pipeline_mode<synchronous>, transform_indices = @transform_1, window_bounds = array<i64: 32, 96>}, {pipeline_mode = #tpu.pipeline_mode<synchronous>, transform_indices = @transform_2, window_bounds = array<i64: 32, 1>}, {pipeline_mode = #tpu.pipeline_mode<synchronous>, transform_indices = @transform_3, window_bounds = array<i64: 32, 1>}, {pipeline_mode = #tpu.pipeline_mode<synchronous>, transform_indices = @transform_4, window_bounds = array<i64: 32, 1>}, {transform_indices = @transform_5, window_bounds = array<i64: 1, 1, 128>}, {transform_indices = @transform_6, window_bounds = array<i64: 1, 32, 128>}]} {
    %c0 = arith.constant 0 : index
    %c0_0 = arith.constant 0 : index
    %c0_1 = arith.constant 0 : index
    %0 = vector.load %arg1[%c0, %c0_0, %c0_1] : memref<1x32x130xf32, #tpu.memory_space<vmem>>, vector<1x32x130xf32>
    %1 = vector.shape_cast %0 : vector<1x32x130xf32> to vector<32x130xf32>
    %2 = vector.extract_strided_slice %1 {offsets = [0, 0], sizes = [32, 128], strides = [1, 1]} : vector<32x130xf32> to vector<32x128xf32>
    %3 = vector.extract_strided_slice %1 {offsets = [0, 1], sizes = [32, 128], strides = [1, 1]} : vector<32x130xf32> to vector<32x128xf32>
    %4 = vector.extract_strided_slice %1 {offsets = [0, 2], sizes = [32, 128], strides = [1, 1]} : vector<32x130xf32> to vector<32x128xf32>
    %5 = tpu.concatenate %2, %3, %4 in 0 : vector<32x128xf32>, vector<32x128xf32>, vector<32x128xf32> -> vector<96x128xf32>
    %c0_2 = arith.constant 0 : index
    %c0_3 = arith.constant 0 : index
    %6 = vector.load %arg2[%c0_2, %c0_3] : memref<32x96xf32, #tpu.memory_space<vmem>>, vector<32x96xf32>
    %cst = arith.constant dense<0.000000e+00> : vector<32x128xf32>
    %7 = tpu.matmul %6, %5, %cst {dimension_numbers = #tpu.dot_dimension_numbers<[1], [0], [0], [1], [0, 0, 1, 1], [], []>} : vector<32x96xf32>, vector<96x128xf32>, vector<32x128xf32> -> vector<32x128xf32>
    %c0_4 = arith.constant 0 : index
    %c0_5 = arith.constant 0 : index
    %8 = vector.load %arg3[%c0_4, %c0_5] : memref<32x1xf32, #tpu.memory_space<vmem>>, vector<32x1xf32>
    %9 = vector.broadcast %8 : vector<32x1xf32> to vector<32x128xf32>
    %10 = arith.addf %7, %9 : vector<32x128xf32>
    %11 = tpu.iota {dimensions = array<i32: 1>} : vector<1x128xi32>
    %c16_i32 = arith.constant 16 : i32
    %12 = vector.broadcast %c16_i32 : i32 to vector<1x128xi32>
    %13 = arith.cmpi slt, %11, %12 : vector<1x128xi32>
    %14 = arith.extui %13 : vector<1x128xi1> to vector<1x128xi32>
    %15 = arith.sitofp %14 : vector<1x128xi32> to vector<1x128xf32>
    %16 = vector.broadcast %15 : vector<1x128xf32> to vector<32x128xf32>
    %17 = arith.mulf %10, %16 : vector<32x128xf32>
    %cst_6 = arith.constant dense<0.000000e+00> : vector<32xf32>
    %18 = vector.multi_reduction <add>, %17, %cst_6 [1] : vector<32x128xf32> to vector<32xf32>
    %19 = vector.shape_cast %18 : vector<32xf32> to vector<32x1xf32>
    %20 = arith.mulf %17, %17 : vector<32x128xf32>
    %cst_7 = arith.constant dense<0.000000e+00> : vector<32xf32>
    %21 = vector.multi_reduction <add>, %20, %cst_7 [1] : vector<32x128xf32> to vector<32xf32>
    %22 = vector.shape_cast %21 : vector<32xf32> to vector<32x1xf32>
    %23 = vector.shape_cast %19 : vector<32x1xf32> to vector<4x8x1xf32>
    %cst_8 = arith.constant dense<0.000000e+00> : vector<4x1xf32>
    %24 = vector.multi_reduction <add>, %23, %cst_8 [1] : vector<4x8x1xf32> to vector<4x1xf32>
    %25 = vector.shape_cast %24 : vector<4x1xf32> to vector<4x1x1xf32>
    %26 = vector.shape_cast %22 : vector<32x1xf32> to vector<4x8x1xf32>
    %cst_9 = arith.constant dense<0.000000e+00> : vector<4x1xf32>
    %27 = vector.multi_reduction <add>, %26, %cst_9 [1] : vector<4x8x1xf32> to vector<4x1xf32>
    %28 = vector.shape_cast %27 : vector<4x1xf32> to vector<4x1x1xf32>
    %cst_10 = arith.constant 1.280000e+02 : f32
    %29 = vector.broadcast %cst_10 : f32 to vector<4x1x1xf32>
    %30 = arith.divf %25, %29 : vector<4x1x1xf32>
    %cst_11 = arith.constant 1.280000e+02 : f32
    %31 = vector.broadcast %cst_11 : f32 to vector<4x1x1xf32>
    %32 = arith.divf %28, %31 : vector<4x1x1xf32>
    %33 = arith.mulf %30, %30 : vector<4x1x1xf32>
    %34 = arith.subf %32, %33 : vector<4x1x1xf32>
    %cst_12 = arith.constant 0.000000e+00 : f32
    %35 = vector.broadcast %cst_12 : f32 to vector<4x1x1xf32>
    %36 = arith.maximumf %34, %35 : vector<4x1x1xf32>
    %cst_13 = arith.constant 9.99999974E-6 : f32
    %37 = vector.broadcast %cst_13 : f32 to vector<4x1x1xf32>
    %38 = arith.addf %36, %37 : vector<4x1x1xf32>
    %39 = math.rsqrt %38 : vector<4x1x1xf32>
    %c0_14 = arith.constant 0 : index
    %c0_15 = arith.constant 0 : index
    %40 = vector.load %arg4[%c0_14, %c0_15] : memref<32x1xf32, #tpu.memory_space<vmem>>, vector<32x1xf32>
    %41 = vector.shape_cast %40 : vector<32x1xf32> to vector<4x8x1xf32>
    %c0_16 = arith.constant 0 : index
    %c0_17 = arith.constant 0 : index
    %42 = vector.load %arg5[%c0_16, %c0_17] : memref<32x1xf32, #tpu.memory_space<vmem>>, vector<32x1xf32>
    %43 = vector.shape_cast %42 : vector<32x1xf32> to vector<4x8x1xf32>
    %44 = vector.broadcast %39 : vector<4x1x1xf32> to vector<4x8x1xf32>
    %45 = arith.mulf %41, %44 : vector<4x8x1xf32>
    %46 = vector.broadcast %30 : vector<4x1x1xf32> to vector<4x8x1xf32>
    %47 = arith.mulf %46, %45 : vector<4x8x1xf32>
    %48 = arith.subf %43, %47 : vector<4x8x1xf32>
    %49 = vector.shape_cast %45 : vector<4x8x1xf32> to vector<32x1xf32>
    %50 = vector.broadcast %49 : vector<32x1xf32> to vector<32x128xf32>
    %51 = arith.mulf %10, %50 : vector<32x128xf32>
    %52 = vector.shape_cast %48 : vector<4x8x1xf32> to vector<32x1xf32>
    %53 = vector.broadcast %52 : vector<32x1xf32> to vector<32x128xf32>
    %54 = arith.addf %51, %53 : vector<32x128xf32>
    %c0_18 = arith.constant 0 : index
    %c0_19 = arith.constant 0 : index
    %c0_20 = arith.constant 0 : index
    %55 = vector.load %arg6[%c0_18, %c0_19, %c0_20] : memref<1x1x128xf32, #tpu.memory_space<vmem>>, vector<1x1x128xf32>
    %56 = vector.shape_cast %55 : vector<1x1x128xf32> to vector<1x128xf32>
    %cst_21 = arith.constant 0.000000e+00 : f32
    %57 = vector.broadcast %cst_21 : f32 to vector<1x128xf32>
    %58 = arith.cmpf one, %56, %57 : vector<1x128xf32>
    %cst_22 = arith.constant 0.000000e+00 : f32
    %59 = vector.shape_cast %58 : vector<1x128xi1> to vector<1x128xi1>
    %60 = vector.broadcast %59 : vector<1x128xi1> to vector<32x128xi1>
    %61 = vector.broadcast %cst_22 : f32 to vector<32x128xf32>
    %62 = arith.select %60, %54, %61 : vector<32x128xi1>, vector<32x128xf32>
    %c0_23 = arith.constant 0 : index
    %c0_24 = arith.constant 0 : index
    %c0_25 = arith.constant 0 : index
    %63 = vector.load %arg7[%c0_23, %c0_24, %c0_25] : memref<1x32x128xf32, #tpu.memory_space<vmem>>, vector<1x32x128xf32>
    %64 = vector.shape_cast %63 : vector<1x32x128xf32> to vector<32x128xf32>
    %65 = vector.shape_cast %62 : vector<32x128xf32> to vector<1x32x128xf32>
    tpu.vector_store %arg7[%c0_23, %c0_24, %c0_25], %65 {strides = array<i32>} : memref<1x32x128xf32, #tpu.memory_space<vmem>>, vector<1x32x128xf32>,
    return
  }
  func.func @transform_0(%arg0: i32) -> (i32, i32, i32) {
    %c0_i32 = arith.constant 0 : i32
    %c0_i32_0 = arith.constant 0 : i32
    %c0_i32_1 = arith.constant 0 : i32
    return %arg0, %c0_i32, %c0_i32_0 : i32, i32, i32
  }
  func.func @transform_1(%arg0: i32) -> (i32, i32) {
    %c0_i32 = arith.constant 0 : i32
    %c0_i32_0 = arith.constant 0 : i32
    %c0_i32_1 = arith.constant 0 : i32
    return %c0_i32, %c0_i32_0 : i32, i32
  }
  func.func @transform_2(%arg0: i32) -> (i32, i32) {
    %c0_i32 = arith.constant 0 : i32
    %c0_i32_0 = arith.constant 0 : i32
    %c0_i32_1 = arith.constant 0 : i32
    return %c0_i32, %c0_i32_0 : i32, i32
  }
  func.func @transform_3(%arg0: i32) -> (i32, i32) {
    %c0_i32 = arith.constant 0 : i32
    %c0_i32_0 = arith.constant 0 : i32
    %c0_i32_1 = arith.constant 0 : i32
    return %c0_i32, %c0_i32_0 : i32, i32
  }
  func.func @transform_4(%arg0: i32) -> (i32, i32) {
    %c0_i32 = arith.constant 0 : i32
    %c0_i32_0 = arith.constant 0 : i32
    %c0_i32_1 = arith.constant 0 : i32
    return %c0_i32, %c0_i32_0 : i32, i32
  }
  func.func @transform_5(%arg0: i32) -> (i32, i32, i32) {
    %c0_i32 = arith.constant 0 : i32
    %c0_i32_0 = arith.constant 0 : i32
    %c0_i32_1 = arith.constant 0 : i32
    return %arg0, %c0_i32, %c0_i32_0 : i32, i32, i32
  }
  func.func @transform_6(%arg0: i32) -> (i32, i32, i32) {
    %c0_i32 = arith.constant 0 : i32
    %c0_i32_0 = arith.constant 0 : i32
    %c0_i32_1 = arith.constant 0 : i32
    return %arg0, %c0_i32, %c0_i32_0 : i32, i32, i32
  }
}

</mosaic_0001>

<llo_original>
// kernel: tpu_custom_call.1
$region0: #{tpu_custom_call.1}
  #allocation0 [shape = 'u32[]', space=smem, size = 0x4, offset = 0x4, fixed_abs, tag = 'smem constant byte address 0x4 - core index']
  #allocation1 [shape = 'u32[144,128]{1,0:T(1,128)}', space=vmem, size = 0x12000, scoped, tag = 'internal scratch']
  %s0 = inlined_call_operand.hbm [shape: f32[2,32,130], index: 0, kind: input, shape index: {}]
  %s1 = inlined_call_operand.hbm [shape: f32[32,96], index: 1, kind: input, shape index: {}]
  %s2 = inlined_call_operand.hbm [shape: f32[32,1], index: 2, kind: input, shape index: {}]
  %s3 = inlined_call_operand.hbm [shape: f32[32,1], index: 3, kind: input, shape index: {}]
  %s4 = inlined_call_operand.hbm [shape: f32[32,1], index: 4, kind: input, shape index: {}]
  %s5 = inlined_call_operand.hbm [shape: f32[2,1,128], index: 5, kind: input, shape index: {}]
  %s6 = inlined_call_operand.hbm [shape: f32[2,32,128], index: 6, kind: output, shape index: {}]
  %s7 = sld [smem:[#allocation0]]
  $region81: #{tpu_custom_call.1} parent=0
    _
  %s9 = ssub.s32 1, %s7
  %s10 = scalar_select 0, %s9, %s7
  $region1: #{tpu_custom_call.1} parent=0
    #allocation2 [shape = 'u8[65536]{0}', space=vmem, size = 0x10000, scoped, tag = 'input window, operand 0']
    #allocation3 [shape = 's32[2]{0}', space=sflag, size = 0x8, scoped, tag = 'scoped memory for tpu_custom_call.1']
    #allocation4 [shape = 's32[2]{0}', space=sflag, size = 0x8, scoped, tag = 'scoped memory for tpu_custom_call.1']
    #allocation5 [shape = 'u8[16384]{0}', space=vmem, size = 0x4000, scoped, tag = 'input window, operand 1, single buffered']
    #allocation6 [shape = 's32[1]{0}', space=sflag, size = 0x4, scoped, tag = 'scoped memory for tpu_custom_call.1']
    #allocation7 [shape = 'u8[16384]{0}', space=vmem, size = 0x4000, scoped, tag = 'input window, operand 2, single buffered']
    #allocation8 [shape = 'u8[16384]{0}', space=vmem, size = 0x4000, scoped, tag = 'input window, operand 3, single buffered']
    #allocation9 [shape = 's32[1]{0}', space=sflag, size = 0x4, scoped, tag = 'scoped memory for tpu_custom_call.1']
    #allocation10 [shape = 'u8[16384]{0}', space=vmem, size = 0x4000, scoped, tag = 'input window, operand 4, single buffered']
    #allocation11 [shape = 'u8[1024]{0}', space=vmem, size = 0x400, scoped, tag = 'input window, operand 5']
    #allocation12 [shape = 's32[2]{0}', space=sflag, size = 0x8, scoped, tag = 'scoped memory for tpu_custom_call.1']
    #allocation13 [shape = 'u8[32768]{0}', space=vmem, size = 0x8000, scoped, tag = 'output window, operand 0']
    %11 = vsyncpa [#allocation3], 0
    %s12 = scalar_lea.sflag [#allocation3], 1
    %13 = vsyncpa %s12, 0
    %14 = vsyncpa [#allocation6], 0
    %15 = vsyncpa [#allocation9], 0
    %16 = vsyncpa [#allocation12], 0
    %s17 = scalar_lea.sflag [#allocation12], 1
    %18 = vsyncpa %s17, 0
    %19 = vsyncpa [#allocation4], 0
    %s20 = scalar_lea.sflag [#allocation4], 1
    %21 = vsyncpa %s20, 0
    loop: start=0, step=1, limit=4
    $region2: #{tpu_custom_call.1} parent=1 // loop_pre_header
      _
    $region3: #{tpu_custom_call.1} parent=1 // loop_header
      %s23 = sphi 0, %s27
      %p24 = scmp.ge.s32.totalorder %s23, 4
      %s33 = sphi 0, %s35
      %s36 = sphi 0, %s33
      %s37 = sphi 0, %s36
      %s53 = sphi 0, %s37
      %s57 = sphi 0, %s57
      %s59 = sphi 0, %s57
      %s60 = sphi 0, %s59
      %s74 = sphi 0, %s60
      %s78 = sphi 0, %s78
      %s80 = sphi 0, %s78
      %s81 = sphi 0, %s80
      %s95 = sphi 0, %s81
      %s99 = sphi 0, %s99
      %s101 = sphi 0, %s99
      %s102 = sphi 0, %s101
      %s116 = sphi 0, %s102
      %s120 = sphi 0, %s120
      %s122 = sphi 0, %s120
      %s123 = sphi 0, %s122
      %s137 = sphi 0, %s123
      %s143 = sphi 0, %s145
      %s146 = sphi 0, %s143
      %s147 = sphi 0, %s146
      %s163 = sphi 0, %s147
      %s169 = sphi 0, %s171
      %s172 = sphi 0, %s169
      %s173 = sphi 0, %s172
      %s189 = sphi 0, %s173
    $region4: #{tpu_custom_call.1} parent=1 // loop_header_branch
      %26 = sbr.rel (%p24) target = $region8
    $region5: #{tpu_custom_call.1} parent=1 // loop_body
      %s28 = ssub.s32 %s23, 1
      %s29 = ssub.s32 %s23, 2
      %s30 = sadd.s32 %s23, 1
      %s31 = ssub.s32 %s23, %s30
      %p32 = scmp.eq.s32.totalorder %s31, 0
      %s34 = sadd.s32 %s33, 1
      %s35 = scalar_select %p32, %s33, %s34
      %p38 = pneg %p32
      %p39 = scmp.eq.s32.totalorder %s23, 1
      %p40 = por %p38, %p39
      %p41 = scmp.ne.s32.totalorder %s33, %s36
      %p42 = scmp.eq.s32.totalorder %s23, 0
      %p43 = por %p41, %p42
      %p44 = scmp.ne.s32.totalorder %s33, %s36
      %p45 = scmp.eq.s32.totalorder %s28, 1
      %p46 = por %p44, %p45
      %p47 = scmp.ne.s32.totalorder %s36, %s37
      %p48 = scmp.eq.s32.totalorder %s28, 0
      %p49 = por %p47, %p48
      %p50 = scmp.ne.s32.totalorder %s36, %s37
      %p51 = scmp.eq.s32.totalorder %s29, 1
      %p52 = por %p50, %p51
      %p54 = scmp.ne.s32.totalorder %s37, %s53
      %p55 = scmp.eq.s32.totalorder %s29, 0
      %p56 = por %p54, %p55
      %s58 = sadd.s32 %s57, 1
      %p61 = scmp.eq.s32.totalorder %s23, 1
      %p62 = scmp.ne.s32.totalorder %s57, %s59
      %p63 = scmp.eq.s32.totalorder %s23, 0
      %p64 = por %p62, %p63
      %p65 = scmp.ne.s32.totalorder %s57, %s59
      %p66 = scmp.eq.s32.totalorder %s28, 1
      %p67 = por %p65, %p66
      %p68 = scmp.ne.s32.totalorder %s59, %s60
      %p69 = scmp.eq.s32.totalorder %s28, 0
      %p70 = por %p68, %p69
      %p71 = scmp.ne.s32.totalorder %s59, %s60
      %p72 = scmp.eq.s32.totalorder %s29, 1
      %p73 = por %p71, %p72
      %p75 = scmp.ne.s32.totalorder %s60, %s74
      %p76 = scmp.eq.s32.totalorder %s29, 0
      %p77 = por %p75, %p76
      %s79 = sadd.s32 %s78, 1
      %p82 = scmp.eq.s32.totalorder %s23, 1
      %p83 = scmp.ne.s32.totalorder %s78, %s80
      %p84 = scmp.eq.s32.totalorder %s23, 0
      %p85 = por %p83, %p84
      %p86 = scmp.ne.s32.totalorder %s78, %s80
      %p87 = scmp.eq.s32.totalorder %s28, 1
      %p88 = por %p86, %p87
      %p89 = scmp.ne.s32.totalorder %s80, %s81
      %p90 = scmp.eq.s32.totalorder %s28, 0
      %p91 = por %p89, %p90
      %p92 = scmp.ne.s32.totalorder %s80, %s81
      %p93 = scmp.eq.s32.totalorder %s29, 1
      %p94 = por %p92, %p93
      %p96 = scmp.ne.s32.totalorder %s81, %s95
      %p97 = scmp.eq.s32.totalorder %s29, 0
      %p98 = por %p96, %p97
      %s100 = sadd.s32 %s99, 1
      %p103 = scmp.eq.s32.totalorder %s23, 1
      %p104 = scmp.ne.s32.totalorder %s99, %s101
      %p105 = scmp.eq.s32.totalorder %s23, 0
      %p106 = por %p104, %p105
      %p107 = scmp.ne.s32.totalorder %s99, %s101
      %p108 = scmp.eq.s32.totalorder %s28, 1
      %p109 = por %p107, %p108
      %p110 = scmp.ne.s32.totalorder %s101, %s102
      %p111 = scmp.eq.s32.totalorder %s28, 0
      %p112 = por %p110, %p111
      %p113 = scmp.ne.s32.totalorder %s101, %s102
      %p114 = scmp.eq.s32.totalorder %s29, 1
      %p115 = por %p113, %p114
      %p117 = scmp.ne.s32.totalorder %s102, %s116
      %p118 = scmp.eq.s32.totalorder %s29, 0
      %p119 = por %p117, %p118
      %s121 = sadd.s32 %s120, 1
      %p124 = scmp.eq.s32.totalorder %s23, 1
      %p125 = scmp.ne.s32.totalorder %s120, %s122
      %p126 = scmp.eq.s32.totalorder %s23, 0
      %p127 = por %p125, %p126
      %p128 = scmp.ne.s32.totalorder %s120, %s122
      %p129 = scmp.eq.s32.totalorder %s28, 1
      %p130 = por %p128, %p129
      %p131 = scmp.ne.s32.totalorder %s122, %s123
      %p132 = scmp.eq.s32.totalorder %s28, 0
      %p133 = por %p131, %p132
      %p134 = scmp.ne.s32.totalorder %s122, %s123
      %p135 = scmp.eq.s32.totalorder %s29, 1
      %p136 = por %p134, %p135
      %p138 = scmp.ne.s32.totalorder %s123, %s137
      %p139 = scmp.eq.s32.totalorder %s29, 0
      %p140 = por %p138, %p139
      %s141 = ssub.s32 %s23, %s30
      %p142 = scmp.eq.s32.totalorder %s141, 0
      %s144 = sadd.s32 %s143, 1
      %s145 = scalar_select %p142, %s143, %s144
      %p148 = pneg %p142
      %p149 = scmp.eq.s32.totalorder %s23, 1
      %p150 = por %p148, %p149
      %p151 = scmp.ne.s32.totalorder %s143, %s146
      %p152 = scmp.eq.s32.totalorder %s23, 0
      %p153 = por %p151, %p152
      %p154 = scmp.ne.s32.totalorder %s143, %s146
      %p155 = scmp.eq.s32.totalorder %s28, 1
      %p156 = por %p154, %p155
      %p157 = scmp.ne.s32.totalorder %s146, %s147
      %p158 = scmp.eq.s32.totalorder %s28, 0
      %p159 = por %p157, %p158
      %p160 = scmp.ne.s32.totalorder %s146, %s147
      %p161 = scmp.eq.s32.totalorder %s29, 1
      %p162 = por %p160, %p161
      %p164 = scmp.ne.s32.totalorder %s147, %s163
      %p165 = scmp.eq.s32.totalorder %s29, 0
      %p166 = por %p164, %p165
      %s167 = ssub.s32 %s23, %s30
      %p168 = scmp.eq.s32.totalorder %s167, 0
      %s170 = sadd.s32 %s169, 1
      %s171 = scalar_select %p168, %s169, %s170
      %p174 = pneg %p168
      %p175 = scmp.eq.s32.totalorder %s23, 1
      %p176 = por %p174, %p175
      %p177 = scmp.ne.s32.totalorder %s169, %s172
      %p178 = scmp.eq.s32.totalorder %s23, 0
      %p179 = por %p177, %p178
      %p180 = scmp.ne.s32.totalorder %s169, %s172
      %p181 = scmp.eq.s32.totalorder %s28, 1
      %p182 = por %p180, %p181
      %p183 = scmp.ne.s32.totalorder %s172, %s173
      %p184 = scmp.eq.s32.totalorder %s28, 0
      %p185 = por %p183, %p184
      %p186 = scmp.ne.s32.totalorder %s172, %s173
      %p187 = scmp.eq.s32.totalorder %s29, 1
      %p188 = por %p186, %p187
      %p190 = scmp.ne.s32.totalorder %s173, %s189
      %p191 = scmp.eq.s32.totalorder %s29, 0
      %p192 = por %p190, %p191
      %p193 = scmp.le.s32.totalorder 1, %s23
      %p194 = scmp.lt.s32.totalorder %s23, 3
      %p195 = pnand %p193, %p194
      %p196 = pneg %p195
      // Predicated region
      $region9: #{tpu_custom_call.1} parent=5 // pred_check
        _
      $region10: #{tpu_custom_call.1} parent=5 // pred_check_branch
        %198 = sbr.rel (%p195) target = $region12
      $region11: #{tpu_custom_call.1} parent=5 // pred_region
        %s199 = ssub.s32 %s23, 1
        // Predicated region
        $region13: #{tpu_custom_call.1} parent=11 // pred_check
          %p200 = pneg %p70
        $region14: #{tpu_custom_call.1} parent=11 // pred_check_branch
          %202 = sbr.rel (%p200) target = $region16
        $region15: #{tpu_custom_call.1} parent=11 // pred_region
          %s204 = ssub.s32 512, 512
          %205 = vsyncadd [#allocation6], %s204
          %s206 = sshll.u32 [#allocation5], 4
          %s207 = int_to_ptr.vmem [resolvable:$true] %s206
          %212 = dma.hbm_to_vmem [thread:$0]  %s1, 512, %s207, [#allocation6], 128, 128, 8
        $region16: #{tpu_custom_call.1} parent=11 // pred_fallthru
          _
        // Predicated region
        $region17: #{tpu_custom_call.1} parent=11 // pred_check
          %p213 = pneg %p91
        $region18: #{tpu_custom_call.1} parent=11 // pred_check_branch
          %215 = sbr.rel (%p213) target = $region20
        $region19: #{tpu_custom_call.1} parent=11 // pred_region
          %s217 = ssub.s32 512, 512
          %218 = vsyncadd [#allocation6], %s217
          %s219 = sshll.u32 [#allocation7], 4
          %s220 = int_to_ptr.vmem [resolvable:$true] %s219
          %225 = dma.hbm_to_vmem [thread:$0]  %s2, 512, %s220, [#allocation6], 128, 128, 8
        $region20: #{tpu_custom_call.1} parent=11 // pred_fallthru
          _
        // Predicated region
        $region21: #{tpu_custom_call.1} parent=11 // pred_check
          %p226 = pneg %p112
        $region22: #{tpu_custom_call.1} parent=11 // pred_check_branch
          %228 = sbr.rel (%p226) target = $region24
        $region23: #{tpu_custom_call.1} parent=11 // pred_region
          %s230 = ssub.s32 512, 512
          %231 = vsyncadd [#allocation9], %s230
          %s232 = sshll.u32 [#allocation8], 4
          %s233 = int_to_ptr.vmem [resolvable:$true] %s232
          %238 = dma.hbm_to_vmem [thread:$0]  %s3, 512, %s233, [#allocation9], 128, 128, 8
        $region24: #{tpu_custom_call.1} parent=11 // pred_fallthru
          _
        // Predicated region
        $region25: #{tpu_custom_call.1} parent=11 // pred_check
          %p239 = pneg %p133
        $region26: #{tpu_custom_call.1} parent=11 // pred_check_branch
          %241 = sbr.rel (%p239) target = $region28
        $region27: #{tpu_custom_call.1} parent=11 // pred_region
          %s243 = ssub.s32 512, 512
          %244 = vsyncadd [#allocation9], %s243
          %s245 = sshll.u32 [#allocation10], 4
          %s246 = int_to_ptr.vmem [resolvable:$true] %s245
          %251 = dma.hbm_to_vmem [thread:$0]  %s4, 512, %s246, [#allocation9], 128, 128, 8
        $region28: #{tpu_custom_call.1} parent=11 // pred_fallthru
          _
      $region12: #{tpu_custom_call.1} parent=5 // pred_fallthru
        _
      %p252 = scmp.lt.s32.totalorder %s23, 2
      // Predicated region
      $region29: #{tpu_custom_call.1} parent=5 // pred_check
        %p253 = pneg %p252
      $region30: #{tpu_custom_call.1} parent=5 // pred_check_branch
        %255 = sbr.rel (%p253) target = $region32
      $region31: #{tpu_custom_call.1} parent=5 // pred_region
        // Predicated region
        $region33: #{tpu_custom_call.1} parent=31 // pred_check
          %p256 = pneg %p43
        $region34: #{tpu_custom_call.1} parent=31 // pred_check_branch
          %258 = sbr.rel (%p256) target = $region36
        $region35: #{tpu_custom_call.1} parent=31 // pred_region
          %s259 = sand.u32 %s33, 1
          %s260 = scalar_lea.sflag [#allocation3], %s259
          %s261 = sand.u32 %s33, 1
          %s262 = smul.addr %s261, 64
          %s263 = scalar_lea.vmem [#allocation2], %s262
          %s265 = ssub.s32 1024, 1024
          %266 = vsyncadd %s260, %s265
          %s267 = smul.addr %s23, 8
          %s268 = smul.addr %s267, 128
          %s269 = scalar_lea.hbm %s0, %s268
          %s270 = sshll.u32 %s263, 4
          %s271 = int_to_ptr.vmem [resolvable:$true] %s270
          %276 = dma.hbm_to_vmem [thread:$0]  %s269, 1024, %s271, %s260, 256, 256, 16
        $region36: #{tpu_custom_call.1} parent=31 // pred_fallthru
          _
        // Predicated region
        $region37: #{tpu_custom_call.1} parent=31 // pred_check
          %p277 = pneg %p153
        $region38: #{tpu_custom_call.1} parent=31 // pred_check_branch
          %279 = sbr.rel (%p277) target = $region40
        $region39: #{tpu_custom_call.1} parent=31 // pred_region
          %s280 = sand.u32 %s143, 1
          %s281 = scalar_lea.sflag [#allocation12], %s280
          %s282 = sand.u32 %s143, 1
          %s283 = scalar_lea.vmem [#allocation11], %s282
          %s285 = ssub.s32 16, 16
          %286 = vsyncadd %s281, %s285
          %s287 = smul.addr %s23, 16
          %s288 = scalar_lea.hbm %s5, %s287
          %s290 = sshll.u32 %s283, 4
          %s291 = int_to_ptr.vmem [resolvable:$true] %s290
          %293 = dma.hbm_to_vmem [thread:$0]  %s288, 16, %s291, %s281
        $region40: #{tpu_custom_call.1} parent=31 // pred_fallthru
          _
      $region32: #{tpu_custom_call.1} parent=5 // pred_fallthru
        _
      %p294 = scmp.le.s32.totalorder 1, %s23
      %p295 = scmp.lt.s32.totalorder %s23, 3
      %p296 = pnand %p294, %p295
      %p297 = pneg %p296
      // Predicated region
      $region41: #{tpu_custom_call.1} parent=5 // pred_check
        _
      $region42: #{tpu_custom_call.1} parent=5 // pred_check_branch
        %299 = sbr.rel (%p296) target = $region44
      $region43: #{tpu_custom_call.1} parent=5 // pred_region
        %s300 = ssub.s32 %s23, 1
        %s301 = sand.u32 %s36, 1
        %s302 = scalar_lea.sflag [#allocation3], %s301
        %s303 = sand.u32 %s36, 1
        %s304 = smul.addr %s303, 64
        %s305 = scalar_lea.vmem [#allocation2], %s304
        // Predicated region
        $region45: #{tpu_custom_call.1} parent=43 // pred_check
          %p306 = pneg %p49
        $region46: #{tpu_custom_call.1} parent=43 // pred_check_branch
          %308 = sbr.rel (%p306) target = $region48
        $region47: #{tpu_custom_call.1} parent=43 // pred_region
          %309 = dma.done %s302, 1024
        $region48: #{tpu_custom_call.1} parent=43 // pred_fallthru
          _
        // Predicated region
        $region49: #{tpu_custom_call.1} parent=43 // pred_check
          %p310 = pneg %p70
        $region50: #{tpu_custom_call.1} parent=43 // pred_check_branch
          %312 = sbr.rel (%p310) target = $region52
        $region51: #{tpu_custom_call.1} parent=43 // pred_region
          %313 = dma.done [#allocation6], 512
        $region52: #{tpu_custom_call.1} parent=43 // pred_fallthru
          _
        // Predicated region
        $region53: #{tpu_custom_call.1} parent=43 // pred_check
          %p314 = pneg %p91
        $region54: #{tpu_custom_call.1} parent=43 // pred_check_branch
          %316 = sbr.rel (%p314) target = $region56
        $region55: #{tpu_custom_call.1} parent=43 // pred_region
          %317 = dma.done [#allocation6], 512
        $region56: #{tpu_custom_call.1} parent=43 // pred_fallthru
          _
        // Predicated region
        $region57: #{tpu_custom_call.1} parent=43 // pred_check
          %p318 = pneg %p112
        $region58: #{tpu_custom_call.1} parent=43 // pred_check_branch
          %320 = sbr.rel (%p318) target = $region60
        $region59: #{tpu_custom_call.1} parent=43 // pred_region
          %321 = dma.done [#allocation9], 512
        $region60: #{tpu_custom_call.1} parent=43 // pred_fallthru
          _
        // Predicated region
        $region61: #{tpu_custom_call.1} parent=43 // pred_check
          %p322 = pneg %p133
        $region62: #{tpu_custom_call.1} parent=43 // pred_check_branch
          %324 = sbr.rel (%p322) target = $region64
        $region63: #{tpu_custom_call.1} parent=43 // pred_region
          %325 = dma.done [#allocation9], 512
        $region64: #{tpu_custom_call.1} parent=43 // pred_fallthru
          _
        %s326 = sand.u32 %s146, 1
        %s327 = scalar_lea.sflag [#allocation12], %s326
        %s328 = sand.u32 %s146, 1
        %s329 = scalar_lea.vmem [#allocation11], %s328
        // Predicated region
        $region65: #{tpu_custom_call.1} parent=43 // pred_check
          %p330 = pneg %p159
        $region66: #{tpu_custom_call.1} parent=43 // pred_check_branch
          %332 = sbr.rel (%p330) target = $region68
        $region67: #{tpu_custom_call.1} parent=43 // pred_region
          %333 = dma.done %s327, 16
        $region68: #{tpu_custom_call.1} parent=43 // pred_fallthru
          _
        %s334 = sand.u32 %s36, 1
        %s335 = scalar_lea.sflag [#allocation3], %s334
        %s336 = sand.u32 %s36, 1
        %s337 = smul.addr %s336, 64
        %s338 = scalar_lea.vmem [#allocation2], %s337
        %p339 = pneg %p49
        %p340 = pneg %p46
        %p341 = pneg %p70
        %p342 = pneg %p67
        %p343 = pneg %p91
        %p344 = pneg %p88
        %p345 = pneg %p112
        %p346 = pneg %p109
        %p347 = pneg %p133
        %p348 = pneg %p130
        %s349 = sand.u32 %s146, 1
        %s350 = scalar_lea.sflag [#allocation12], %s349
        %s351 = sand.u32 %s146, 1
        %s352 = scalar_lea.vmem [#allocation11], %s351
        %p353 = pneg %p159
        %p354 = pneg %p156
        %p355 = pneg %p185
        %p356 = pneg %p182
        %s357 = sand.u32 %s172, 1
        %s358 = scalar_lea.sflag [#allocation4], %s357
        %s359 = sand.u32 %s172, 1
        %s360 = smul.addr %s359, 32
        %s361 = scalar_lea.vmem [#allocation13], %s360
        %v362 = vld [vmem:[%s305] sm:$0xff]
        %v363 = vld [vmem:[%s305 + $0x8] sm:$0xff]
        %v364 = vld [vmem:[%s305 + $0x10] sm:$0xff]
        %v365 = vld [vmem:[%s305 + $0x18] sm:$0xff]
        %v366 = vld [vmem:[%s305 + $0x20] sm:$0xff]
        %v367 = vld [vmem:[%s305 + $0x28] sm:$0xff]
        %v368 = vld [vmem:[%s305 + $0x30] sm:$0xff]
        %v369 = vld [vmem:[%s305 + $0x38] sm:$0xff]
        %378 = vrot.lane.b32.xlu0 %v362, 127
        %v379 = vpop.permute.xlu0 %378
        %380 = vrot.lane.b32.xlu0 %v363, 127
        %v381 = vpop.permute.xlu0 %380
        %382 = vrot.lane.b32.xlu0 %v364, 127
        %v383 = vpop.permute.xlu0 %382
        %384 = vrot.lane.b32.xlu0 %v365, 127
        %v385 = vpop.permute.xlu0 %384
        %386 = vrot.lane.b32.xlu0 %v366, 127
        %v387 = vpop.permute.xlu0 %386
        %388 = vrot.lane.b32.xlu0 %v367, 127
        %v389 = vpop.permute.xlu0 %388
        %390 = vrot.lane.b32.xlu0 %v368, 127
        %v391 = vpop.permute.xlu0 %390
        %392 = vrot.lane.b32.xlu0 %v369, 127
        %v393 = vpop.permute.xlu0 %392
        %vm394 = vcmask 1039360
        %v395 = vsel %vm394, %v379, %v381
        %v396 = vsel %vm394, %v383, %v385
        %v397 = vsel %vm394, %v387, %v389
        %v398 = vsel %vm394, %v391, %v393
        %403 = vrot.lane.b32.xlu0 %v362, 126
        %v404 = vpop.permute.xlu0 %403
        %405 = vrot.lane.b32.xlu0 %v363, 126
        %v406 = vpop.permute.xlu0 %405
        %407 = vrot.lane.b32.xlu0 %v364, 126
        %v408 = vpop.permute.xlu0 %407
        %409 = vrot.lane.b32.xlu0 %v365, 126
        %v410 = vpop.permute.xlu0 %409
        %411 = vrot.lane.b32.xlu0 %v366, 126
        %v412 = vpop.permute.xlu0 %411
        %413 = vrot.lane.b32.xlu0 %v367, 126
        %v414 = vpop.permute.xlu0 %413
        %415 = vrot.lane.b32.xlu0 %v368, 126
        %v416 = vpop.permute.xlu0 %415
        %417 = vrot.lane.b32.xlu0 %v369, 126
        %v418 = vpop.permute.xlu0 %417
        %vm419 = vcmask 1031168
        %v420 = vsel %vm419, %v404, %v406
        %v421 = vsel %vm419, %v408, %v410
        %v422 = vsel %vm419, %v412, %v414
        %v423 = vsel %vm419, %v416, %v418
        %v428 = vld [vmem:[#allocation5] sm:$0xff]
        %v429 = vld [vmem:[#allocation5 + $0x8] sm:$0xff]
        %v430 = vld [vmem:[#allocation5 + $0x10] sm:$0xff]
        %v431 = vld [vmem:[#allocation5 + $0x18] sm:$0xff]
        %v432 = vld [vmem:[#allocation7] sm:$0xff]
        %v433 = vld [vmem:[#allocation7 + $0x8] sm:$0xff]
        %v434 = vld [vmem:[#allocation7 + $0x10] sm:$0xff]
        %v435 = vld [vmem:[#allocation7 + $0x18] sm:$0xff]
        %437 = vset.pattern.permute.xlu0 0
        %438 = vperm.xlu0 %437, %v432
        %v439 = vpop.permute.xlu0 %438
        %442 = vset.pattern.permute.xlu0 0
        %443 = vperm.xlu0 %442, %v433
        %v444 = vpop.permute.xlu0 %443
        %447 = vset.pattern.permute.xlu0 0
        %448 = vperm.xlu0 %447, %v434
        %v449 = vpop.permute.xlu0 %448
        %452 = vset.pattern.permute.xlu0 0
        %453 = vperm.xlu0 %452, %v435
        %v454 = vpop.permute.xlu0 %453
        %vm456 = vcmask 785408
        %v458 = vsel %vm456, %v428, 0
        %v461 = vsel %vm456, %v429, 0
        %v464 = vsel %vm456, %v430, 0
        %v467 = vsel %vm456, %v431, 0
        %469 = vmatprep.subr.mxu0 0.0
        %470 = vmatpush1.msra.mxu0 %v362
        %471 = vmatprep.subr.mxu0 0.0
        %472 = vmatpush1.msra.mxu0 %v364
        %473 = vmatprep.subr.mxu0 0.0
        %474 = vmatpush1.msra.mxu0 %v366
        %475 = vmatprep.subr.mxu0 0.0
        %476 = vmatpush1.msra.mxu0 %v368
        %477 = vmatprep.subr.mxu0 0.0
        %478 = vmatpush1.msra.mxu0 %v395
        %479 = vmatprep.subr.mxu0 0.0
        %480 = vmatpush1.msra.mxu0 %v396
        %481 = vmatprep.subr.mxu0 0.0
        %482 = vmatpush1.msra.mxu0 %v397
        %483 = vmatprep.subr.mxu0 0.0
        %484 = vmatpush1.msra.mxu0 %v398
        %485 = vmatprep.subr.mxu0 0.0
        %486 = vmatpush1.msra.mxu0 %v420
        %487 = vmatprep.subr.mxu0 0.0
        %488 = vmatpush1.msra.mxu0 %v421
        %489 = vmatprep.subr.mxu0 0.0
        %490 = vmatpush1.msra.mxu0 %v422
        %491 = vmatprep.subr.mxu0 0.0
        %492 = vmatpush1.msra.mxu0 %v423
        %493 = vmatprep.subr.mxu0 0.0
        %494 = vmatpush1.msra.mxu0 0.0
        %495 = vmatprep.subr.mxu0 0.0
        %496 = vmatpush1.msra.mxu0 0.0
        %497 = vmatprep.subr.mxu0 0.0
        %498 = vmatpush1.msra.mxu0 0.0
        %499 = vmatprep.subr.mxu0 0.0
        %500 = vmatpush1.msra.mxu0 0.0
        %501 = vmatprep.subr.mxu0 0.0
        %502 = vmatpush1.msra.mxu0 0.0
        %503 = vmatprep.subr.mxu0 0.0
        %504 = vmatpush1.msra.mxu0 0.0
        %505 = vmatprep.subr.mxu0 0.0
        %506 = vmatpush1.msra.mxu0 0.0
        %507 = vmatprep.subr.mxu0 0.0
        %508 = vmatpush1.msra.mxu0 0.0
        %509 = vmatprep.subr.mxu0 0.0
        %510 = vmatpush1.msra.mxu0 0.0
        %511 = vmatprep.subr.mxu0 0.0
        %512 = vmatpush1.msra.mxu0 0.0
        %513 = vmatprep.subr.mxu0 0.0
        %514 = vmatpush1.msra.mxu0 0.0
        %515 = vmatprep.subr.mxu0 0.0
        %516 = vmatpush1.msra.mxu0 0.0
        %517 = vmatprep.subr.mxu0 0.0
        %518 = vmatpush1.msra.mxu0 0.0
        %519 = vmatprep.subr.mxu0 0.0
        %520 = vmatpush1.msra.mxu0 0.0
        %521 = vmatprep.subr.mxu0 0.0
        %522 = vmatpush1.msra.mxu0 0.0
        %523 = vmatprep.subr.mxu0 0.0
        %524 = vmatpush1.msra.mxu0 0.0
        %525 = vmatprep.subr.mxu0 0.0
        %526 = vmatpush1.msra.mxu0 0.0
        %527 = vmatprep.subr.mxu0 0.0
        %528 = vmatpush1.msra.mxu0 0.0
        %529 = vmatprep.subr.mxu0 0.0
        %530 = vmatpush1.msra.mxu0 0.0
        %531 = vmatprep.subr.mxu0 0.0
        %532 = vmatpush1.msra.mxu0 0.0
        %533 = vmatprep.mubr.f32.mxu0 0.0
        %534 = vmatmul.mubr.f32.gmra.mrb[0].mxu0 %v458
        %v535 = vpop.f32.mrb[0].mxu0
        %v536 = vadd.f32 %v439, %v535
        %v537 = vpop.f32.mrb[0].mxu0
        %538 = vmatprep.mubr.f32.mxu0 0.0
        %539 = vmatmul.mubr.f32.gmra.mrb[0].mxu0 %v461
        %v540 = vpop.f32.mrb[0].mxu0
        %v541 = vadd.f32 %v444, %v540
        %v542 = vpop.f32.mrb[0].mxu0
        %543 = vmatprep.mubr.f32.mxu0 0.0
        %544 = vmatmul.mubr.f32.gmra.mrb[0].mxu0 %v464
        %v545 = vpop.f32.mrb[0].mxu0
        %v546 = vadd.f32 %v449, %v545
        %v547 = vpop.f32.mrb[0].mxu0
        %548 = vmatprep.mubr.f32.mxu0 0.0
        %549 = vmatmul.mubr.f32.gmra.mrb[0].mxu0 %v467
        %v550 = vpop.f32.mrb[0].mxu0
        %v551 = vadd.f32 %v454, %v550
        %v552 = vpop.f32.mrb[0].mxu0
        %553 = vdwg.mxu0
        %v554 = vlaneseq
        %v555 = vand.u32 %v554, 127
        %vm556 = vcmp.lt.s32.totalorder %v555, 16
        %v557 = vsel %vm556, 1, 0
        %v558 = vcvt.s32.f32 %v557
        %v559 = vmul.f32 %v536, %v558
        %v560 = vmul.f32 %v541, %v558
        %v561 = vmul.f32 %v546, %v558
        %v562 = vmul.f32 %v551, %v558
        %563 = vadd.xlane.f32.xlu0 %v559
        %v564 = vpop.xlane.xlu0 %563
        %565 = vadd.xlane.f32.xlu0 %v560
        %v566 = vpop.xlane.xlu0 %565
        %567 = vadd.xlane.f32.xlu0 %v561
        %v568 = vpop.xlane.xlu0 %567
        %569 = vadd.xlane.f32.xlu0 %v562
        %v570 = vpop.xlane.xlu0 %569
        %v571 = vmul.f32 %v559, %v559
        %v572 = vmul.f32 %v560, %v560
        %v573 = vmul.f32 %v561, %v561
        %v574 = vmul.f32 %v562, %v562
        %575 = vadd.xlane.f32.xlu0 %v571
        %v576 = vpop.xlane.xlu0 %575
        %577 = vadd.xlane.f32.xlu0 %v572
        %v578 = vpop.xlane.xlu0 %577
        %579 = vadd.xlane.f32.xlu0 %v573
        %v580 = vpop.xlane.xlu0 %579
        %581 = vadd.xlane.f32.xlu0 %v574
        %v582 = vpop.xlane.xlu0 %581
        %v583 = vrot.slane %v564, 4
        %v584 = vadd.f32 %v564, %v583
        %v585 = vrot.slane %v584, 2
        %v586 = vadd.f32 %v584, %v585
        %v587 = vrot.slane %v586, 1
        %v588 = vadd.f32 %v586, %v587
        %v589 = vrot.slane %v566, 4
        %v590 = vadd.f32 %v566, %v589
        %v591 = vrot.slane %v590, 2
        %v592 = vadd.f32 %v590, %v591
        %v593 = vrot.slane %v592, 1
        %v594 = vadd.f32 %v592, %v593
        %v595 = vrot.slane %v568, 4
        %v596 = vadd.f32 %v568, %v595
        %v597 = vrot.slane %v596, 2
        %v598 = vadd.f32 %v596, %v597
        %v599 = vrot.slane %v598, 1
        %v600 = vadd.f32 %v598, %v599
        %v601 = vrot.slane %v570, 4
        %v602 = vadd.f32 %v570, %v601
        %v603 = vrot.slane %v602, 2
        %v604 = vadd.f32 %v602, %v603
        %v605 = vrot.slane %v604, 1
        %v606 = vadd.f32 %v604, %v605
        %v607 = vrot.slane %v576, 4
        %v608 = vadd.f32 %v576, %v607
        %v609 = vrot.slane %v608, 2
        %v610 = vadd.f32 %v608, %v609
        %v611 = vrot.slane %v610, 1
        %v612 = vadd.f32 %v610, %v611
        %v613 = vrot.slane %v578, 4
        %v614 = vadd.f32 %v578, %v613
        %v615 = vrot.slane %v614, 2
        %v616 = vadd.f32 %v614, %v615
        %v617 = vrot.slane %v616, 1
        %v618 = vadd.f32 %v616, %v617
        %v619 = vrot.slane %v580, 4
        %v620 = vadd.f32 %v580, %v619
        %v621 = vrot.slane %v620, 2
        %v622 = vadd.f32 %v620, %v621
        %v623 = vrot.slane %v622, 1
        %v624 = vadd.f32 %v622, %v623
        %v625 = vrot.slane %v582, 4
        %v626 = vadd.f32 %v582, %v625
        %v627 = vrot.slane %v626, 2
        %v628 = vadd.f32 %v626, %v627
        %v629 = vrot.slane %v628, 1
        %v630 = vadd.f32 %v628, %v629
        %v631 = vrcp.pop 128.0
        %v632 = vmul.f32 %v588, %v631
        %v633 = vmul.f32 %v594, %v631
        %v634 = vmul.f32 %v600, %v631
        %v635 = vmul.f32 %v606, %v631
        %v636 = vmul.f32 %v612, %v631
        %v637 = vmul.f32 %v618, %v631
        %v638 = vmul.f32 %v624, %v631
        %v639 = vmul.f32 %v630, %v631
        %v640 = vmul.f32 %v632, %v632
        %v641 = vmul.f32 %v633, %v633
        %v642 = vmul.f32 %v634, %v634
        %v643 = vmul.f32 %v635, %v635
        %v644 = vsub.f32 %v636, %v640
        %v645 = vsub.f32 %v637, %v641
        %v646 = vsub.f32 %v638, %v642
        %v647 = vsub.f32 %v639, %v643
        %v648 = vmax.f32 %v644, 0.0
        %v649 = vmax.f32 %v645, 0.0
        %v650 = vmax.f32 %v646, 0.0
        %v651 = vmax.f32 %v647, 0.0
        %v652 = vadd.f32 %v648, 1e-05
        %v653 = vadd.f32 %v649, 1e-05
        %v654 = vadd.f32 %v650, 1e-05
        %v655 = vadd.f32 %v651, 1e-05
        %v656 = vrsqrt.pop %v652
        %v657 = vrsqrt.pop %v653
        %v658 = vrsqrt.pop %v654
        %v659 = vrsqrt.pop %v655
        %v660 = vld [vmem:[#allocation8] sm:$0xff]
        %v661 = vld [vmem:[#allocation8 + $0x8] sm:$0xff]
        %v662 = vld [vmem:[#allocation8 + $0x10] sm:$0xff]
        %v663 = vld [vmem:[#allocation8 + $0x18] sm:$0xff]
        %v664 = vld [vmem:[#allocation10] sm:$0xff]
        %v665 = vld [vmem:[#allocation10 + $0x8] sm:$0xff]
        %v666 = vld [vmem:[#allocation10 + $0x10] sm:$0xff]
        %v667 = vld [vmem:[#allocation10 + $0x18] sm:$0xff]
        %v668 = vmul.f32 %v660, %v656
        %v669 = vmul.f32 %v661, %v657
        %v670 = vmul.f32 %v662, %v658
        %v671 = vmul.f32 %v663, %v659
        %v672 = vmul.f32 %v632, %v668
        %v673 = vmul.f32 %v633, %v669
        %v674 = vmul.f32 %v634, %v670
        %v675 = vmul.f32 %v635, %v671
        %v676 = vsub.f32 %v664, %v672
        %v677 = vsub.f32 %v665, %v673
        %v678 = vsub.f32 %v666, %v674
        %v679 = vsub.f32 %v667, %v675
        %681 = vset.pattern.permute.xlu0 0
        %682 = vperm.xlu0 %681, %v668
        %v683 = vpop.permute.xlu0 %682
        %686 = vset.pattern.permute.xlu0 0
        %687 = vperm.xlu0 %686, %v669
        %v688 = vpop.permute.xlu0 %687
        %691 = vset.pattern.permute.xlu0 0
        %692 = vperm.xlu0 %691, %v670
        %v693 = vpop.permute.xlu0 %692
        %696 = vset.pattern.permute.xlu0 0
        %697 = vperm.xlu0 %696, %v671
        %v698 = vpop.permute.xlu0 %697
        %v700 = vmul.f32 %v536, %v683
        %v701 = vmul.f32 %v541, %v688
        %v702 = vmul.f32 %v546, %v693
        %v703 = vmul.f32 %v551, %v698
        %705 = vset.pattern.permute.xlu0 0
        %706 = vperm.xlu0 %705, %v676
        %v707 = vpop.permute.xlu0 %706
        %710 = vset.pattern.permute.xlu0 0
        %711 = vperm.xlu0 %710, %v677
        %v712 = vpop.permute.xlu0 %711
        %715 = vset.pattern.permute.xlu0 0
        %716 = vperm.xlu0 %715, %v678
        %v717 = vpop.permute.xlu0 %716
        %720 = vset.pattern.permute.xlu0 0
        %721 = vperm.xlu0 %720, %v679
        %v722 = vpop.permute.xlu0 %721
        %v724 = vadd.f32 %v700, %v707
        %v725 = vadd.f32 %v701, %v712
        %v726 = vadd.f32 %v702, %v717
        %v727 = vadd.f32 %v703, %v722
        %v728 = vld [vmem:[%s329] sm:$0x1]
        %vm729 = vcmp.ne.f32.partialorder %v728, 0.0
        %v730 = vsel %vm729, 1, 0
        %v731 = vlaneseq
        %v732 = vshrl.u32 %v731, 7
        %v733 = vsub.s32 0, %v732
        %v734 = vrot.slane %v730, %v733
        %vm735 = vcmp.eq.s32.totalorder %v734, 1
        %v736 = vsel %vm735, %v724, 0.0
        %v737 = vsel %vm735, %v725, 0.0
        %v738 = vsel %vm735, %v726, 0.0
        %v739 = vsel %vm735, %v727, 0.0
        %740 = vst [vmem:[%s361] sm:$0xff] %v736
        %741 = vst [vmem:[%s361 + $0x8] sm:$0xff] %v737
        %742 = vst [vmem:[%s361 + $0x10] sm:$0xff] %v738
        %743 = vst [vmem:[%s361 + $0x18] sm:$0xff] %v739
        %s744 = sand.u32 %s172, 1
        %s745 = scalar_lea.sflag [#allocation4], %s744
        %s746 = sand.u32 %s172, 1
        %s747 = smul.addr %s746, 32
        %s748 = scalar_lea.vmem [#allocation13], %s747
        // Predicated region
        $region69: #{tpu_custom_call.1} parent=43 // pred_check
          %p749 = pneg %p182
        $region70: #{tpu_custom_call.1} parent=43 // pred_check_branch
          %751 = sbr.rel (%p749) target = $region72
        $region71: #{tpu_custom_call.1} parent=43 // pred_region
          %s753 = ssub.s32 512, 512
          %754 = vsyncadd %s745, %s753
          %s755 = smul.addr %s28, 4
          %s756 = smul.addr %s755, 128
          %s757 = scalar_lea.hbm %s6, %s756
          %s758 = sshll.u32 %s748, 4
          %s759 = int_to_ptr.vmem [resolvable:$true] %s758
          %764 = dma.vmem_to_hbm [thread:$0]  %s759, 512, %s757, %s745, 128, 128, 8
        $region72: #{tpu_custom_call.1} parent=43 // pred_fallthru
          _
      $region44: #{tpu_custom_call.1} parent=5 // pred_fallthru
        _
      %p765 = scmp.le.s32.totalorder 2, %s23
      // Predicated region
      $region73: #{tpu_custom_call.1} parent=5 // pred_check
        %p766 = pneg %p765
      $region74: #{tpu_custom_call.1} parent=5 // pred_check_branch
        %768 = sbr.rel (%p766) target = $region76
      $region75: #{tpu_custom_call.1} parent=5 // pred_region
        %s769 = ssub.s32 %s23, 2
        // Predicated region
        $region77: #{tpu_custom_call.1} parent=75 // pred_check
          %p770 = pneg %p188
        $region78: #{tpu_custom_call.1} parent=75 // pred_check_branch
          %772 = sbr.rel (%p770) target = $region80
        $region79: #{tpu_custom_call.1} parent=75 // pred_region
          %s773 = sand.u32 %s173, 1
          %s774 = scalar_lea.sflag [#allocation4], %s773
          %s775 = sand.u32 %s173, 1
          %s776 = smul.addr %s775, 32
          %s777 = scalar_lea.vmem [#allocation13], %s776
          %778 = dma.done %s774, 512
        $region80: #{tpu_custom_call.1} parent=75 // pred_fallthru
          _
      $region76: #{tpu_custom_call.1} parent=5 // pred_fallthru
        _
    $region6: #{tpu_custom_call.1} parent=1 // loop_footer
      %s27 = sadd.s32 1, %s23
    $region7: #{tpu_custom_call.1} parent=1 // loop_footer_branch
      %22 = sbr.rel target = $region3
    $region8: #{tpu_custom_call.1} parent=1 // loop_exit
      _
    %779 = vsyncpa [#allocation3], 1
    %s780 = scalar_lea.sflag [#allocation3], 1
    %781 = vsyncpa %s780, 1
    %782 = vsyncpa [#allocation6], 1
    %783 = vsyncpa [#allocation9], 1
    %784 = vsyncpa [#allocation12], 1
    %s785 = scalar_lea.sflag [#allocation12], 1
    %786 = vsyncpa %s785, 1
    %787 = vsyncpa [#allocation4], 1
    %s788 = scalar_lea.sflag [#allocation4], 1
    %789 = vsyncpa %s788, 1

</llo_original>
